<compile_context>
chip_gen: v5e
topology: v5e:2x2
jax: 0.10.0
libtpu: 0.0.40
codegen_flags: <defaults>
</compile_context>

<pallas_src>
import math
from functools import partial

import jax
import jax.numpy as jnp
from jax.scipy.special import ndtri
from jax.experimental import pallas as pl
from jax.experimental.pallas import tpu as pltpu


_N_BIAS = float(2 ** 15 - 1)   # FQConvBiasQuantization: b_prec = 16 -> n = 2**(16-1) - 1


# --------------------------------------------------------------------------- #
# Fused kernel: multi-precision weight/bias fake-quant + implicit-im2col conv.
#   w_ref    : (Cout, K)      f32, K = Kh*Kw*Cin, column order (kh, kw, cin)
#   q_ref    : (Cout, 6)      f32, [1/w_scale, n_w, w_scale/n_w, bias, 1/b_scale, b_scale/n_b]
#   xblk_ref : (Cin, TM)      bf16 flat padded-input tile
#   halo_ref : (Cin, Hb)      bf16 halo tile immediately following xblk
#   o_ref    : (Cout, TM)     f32
# --------------------------------------------------------------------------- #
def _fused_quant_conv_kernel(w_ref, q_ref, xblk_ref, halo_ref, o_ref, *,
                             taps, cin, tile_m, n_bias):
    # Halo'd input window (lane-aligned concat; both pieces are 128-multiples).
    buf = jnp.concatenate([xblk_ref[...], halo_ref[...]], axis=-1)   # (Cin, TM+Hb)

    # --- fused multi-precision weight fake-quant + one-hot mixing -----------
    # (Constant index_map -> weight stays VMEM resident; this small VPU pass is
    #  recomputed each step so the kernel stays state-free under "parallel".)
    w = w_ref[...]                                                   # (Cout, K) f32
    w_inv, w_n, w_mul = q_ref[:, 0:1], q_ref[:, 1:2], q_ref[:, 2:3]
    wq = jnp.round(jnp.clip(w * w_inv, -1.0, 1.0) * w_n) * w_mul
    wq = wq.astype(buf.dtype)                                        # bf16 MXU operand

    # --- fused bias fake-quant ----------------------------------------------
    b_raw, b_inv, b_mul = q_ref[:, 3:4], q_ref[:, 4:5], q_ref[:, 5:6]
    bq = jnp.round(jnp.clip(b_raw * b_inv, -1.0, 1.0) * n_bias) * b_mul   # (Cout, 1)

    # --- implicit im2col: one shifted window + one small dot per tap --------
    acc = jnp.zeros(o_ref.shape, jnp.float32)
    for t, s in enumerate(taps):                                     # unrolled Kh*Kw
        w_t = wq[:, t * cin:(t + 1) * cin]                           # (Cout, Cin)
        x_t = buf[:, s:s + tile_m]                                   # (Cin, TM)
        acc = acc + jnp.dot(w_t, x_t, preferred_element_type=jnp.float32)
    o_ref[...] = acc + bq


def quant_multiprec_conv2d(x, weight, bias, alpha_weight, scale_params, bits,
                           *, abits=(8,), act_scale, stride=1, padding=1,
                           dilation=1, tile_m=512, compute_dtype=jnp.bfloat16):
    """Pallas implementation of QuantMultiPrecConv2d.forward (NCHW layout)."""
    f32 = jnp.float32
    N, Cin, H, W = x.shape
    Cout, Cin_w, Kh, Kw = weight.shape
    assert Cin_w == Cin, "grouped conv not supported"  # TODO(synk): groups != 1
    nb = len(bits)
    abit = abits[0]
    n_a = float(2 ** abit - 1)

    # ---- per-bit scales + one-hot mix folded to per-output-channel factors --
    sel = jnp.argmax(alpha_weight, axis=0)                            # (Cout,)
    sw = (sel[None, :] == jnp.arange(nb)[:, None]).astype(f32)        # (nb, Cout) one-hot
    es_rows, nw_rows, bs_rows = [], [], []
    for i, bit in enumerate(bits):
        sp = scale_params[i].astype(f32)
        if bit != 2:                       # round_pow2 = True
            es = 2.0 ** jnp.floor(jnp.log2(sp))
        else:                              # round_pow2 = False, per-channel scale
            es = jnp.exp(sp)
        es = jnp.broadcast_to(es, (Cout,))
        n_w = float(2 ** (bit - 1) - 1)
        es_rows.append(es)
        nw_rows.append(jnp.full((Cout,), n_w, f32))
        bs_rows.append(_N_BIAS * (es / n_w) * (act_scale / n_a))
    es_sel = jnp.sum(sw * jnp.stack(es_rows), axis=0)                 # (Cout,)
    nw_sel = jnp.sum(sw * jnp.stack(nw_rows), axis=0)
    bs_sel = jnp.sum(sw * jnp.stack(bs_rows), axis=0)

    b_raw = bias.astype(f32) if bias is not None else jnp.zeros((Cout,), f32)
    # Pack all per-channel quant factors + raw bias into ONE small array.
    qparams = jnp.stack([1.0 / es_sel, nw_sel, es_sel / nw_sel,
                         b_raw, 1.0 / bs_sel, bs_sel / _N_BIAS], axis=1)  # (Cout, 6)

    # Weight as (Cout, Kh*Kw*Cin), K-order (kh, kw, cin) to match in-kernel taps.
    K = Kh * Kw * Cin
    w2d = jnp.transpose(weight.astype(f32), (0, 2, 3, 1)).reshape(Cout, K)

    # ---- flat padded input; im2col happens inside the kernel ----------------
    s, p, d = stride, padding, dilation
    Hp, Wp = H + 2 * p, W + 2 * p
    Ho = (Hp - (d * (Kh - 1) + 1)) // s + 1
    Wo = (Wp - (d * (Kw - 1) + 1)) // s + 1
    L = Hp * Wp                       # flat positions per batch element
    M = N * L                         # stride-1 flat output positions computed

    halo = d * (Kh - 1) * Wp + d * (Kw - 1)       # largest in-kernel tap shift
    hb = max(128, ((halo + 127) // 128) * 128)    # 128-aligned halo block width
    tile_m = max(128, ((tile_m + 127) // 128) * 128)
    if tile_m % hb:
        tile_m = ((tile_m + hb - 1) // hb) * hb   # halo block offset stays aligned
    num_tiles = (M + tile_m - 1) // tile_m
    l_tot = (num_tiles + 1) * tile_m              # main tiles + slack covering last halo

    taps = tuple(kh * d * Wp + kw * d for kh in range(Kh) for kw in range(Kw))

    xt = jnp.transpose(x, (1, 0, 2, 3)).astype(compute_dtype)         # (Cin, N, H, W)
    xp = jnp.pad(xt, ((0, 0), (0, 0), (p, p), (p, p)))                # spatial pad
    xf = jnp.pad(xp.reshape(Cin, M), ((0, 0), (0, l_tot - M)))        # tiny flat tail pad

    kernel = partial(_fused_quant_conv_kernel, taps=taps, cin=Cin,
                     tile_m=tile_m, n_bias=_N_BIAS)

    itemsize = jnp.dtype(compute_dtype).itemsize
    cost = pl.CostEstimate(
        flops=2 * num_tiles * tile_m * K * Cout,
        transcendentals=0,
        bytes_accessed=(Cin * l_tot * itemsize                 # input tiles
                        + num_tiles * Cin * hb * itemsize      # halo re-reads
                        + Cout * num_tiles * tile_m * 4        # output
                        + (w2d.size + qparams.size) * 4))

    blocks_per_tile = tile_m // hb
    out2d = pl.pallas_call(
        kernel,
        out_shape=jax.ShapeDtypeStruct((Cout, num_tiles * tile_m), f32),
        grid=(num_tiles,),
        in_specs=[
            pl.BlockSpec((Cout, K), lambda i: (0, 0)),            # resident weight
            pl.BlockSpec((Cout, 6), lambda i: (0, 0)),            # resident quant factors
            pl.BlockSpec((Cin, tile_m), lambda i: (0, i)),        # flat input tile
            pl.BlockSpec((Cin, hb),                               # halo right after the tile
                         lambda i: (0, (i + 1) * blocks_per_tile)),
        ],
        out_specs=pl.BlockSpec((Cout, tile_m), lambda i: (0, i)),
        compiler_params=pltpu.CompilerParams(
            dimension_semantics=("parallel",)),
        cost_estimate=cost,
    )(w2d, qparams, xf, xf)
    # NOTE: for very large Cout*K (v7x 64 MiB VMEM / v5e 16 MiB scoped default),
    # add a Cout grid axis ("parallel") so the resident weight block shrinks.

    # Valid stride-1 positions, subsampled by stride; transpose back to NCHW.
    # TODO(synk): the NCHW transpose is required by the module's return layout;
    # keep the lane-dense (Cout, M) layout if the consumer allows it.
    y = out2d[:, :M].reshape(Cout, N, Hp, Wp)
    y = y[:, :, :(Ho - 1) * s + 1:s, :(Wo - 1) * s + 1:s]              # (Cout, N, Ho, Wo)
    return jnp.transpose(y, (1, 0, 2, 3))


# --------------------------------------------------------------------------- #
# Pure-JAX references mirroring the PyTorch module.
# --------------------------------------------------------------------------- #
def _mixed_params_reference(weight, bias, alpha_weight, scale_params, bits,
                            abits, act_scale):
    f32 = jnp.float32
    nb = len(bits)
    Cout = weight.shape[0]
    abit = abits[0]
    n_a = 2 ** abit - 1
    n_b = 2 ** 15 - 1
    sel = jnp.argmax(alpha_weight, axis=0)
    sw = (sel[None, :] == jnp.arange(nb)[:, None]).astype(f32)
    mix_w = jnp.zeros(weight.shape, f32)
    mix_b = jnp.zeros((Cout,), f32)
    for i, bit in enumerate(bits):
        sp = scale_params[i].astype(f32)
        es = 2.0 ** jnp.floor(jnp.log2(sp)) if bit != 2 else jnp.exp(sp)
        es = jnp.broadcast_to(es, (Cout,))
        n_w = 2 ** (bit - 1) - 1
        ws = weight.astype(f32) / es.reshape(-1, 1, 1, 1)
        wq = jnp.round(jnp.clip(ws, -1.0, 1.0) * n_w) / n_w
        mix_w = mix_w + (wq * es.reshape(-1, 1, 1, 1)) * sw[i].reshape(Cout, 1, 1, 1)
        if bias is not None:
            bscale = n_b * (es / n_w) * (act_scale / n_a)
            bq = jnp.round(jnp.clip(bias.astype(f32) / bscale, -1.0, 1.0) * n_b) / n_b
            mix_b = mix_b + (bq * bscale) * sw[i]
    return mix_w, (mix_b if bias is not None else None)


def _conv_reference(x, mix_w, mix_b, stride, padding, dilation=1):
    out = jax.lax.conv_general_dilated(
        x.astype(jnp.float32), mix_w,
        window_strides=(stride, stride),
        padding=((padding, padding), (padding, padding)),
        rhs_dilation=(dilation, dilation),
        dimension_numbers=("NCHW", "OIHW", "NCHW"),
        precision=jax.lax.Precision.HIGHEST)
    if mix_b is not None:
        out = out + mix_b.reshape(1, -1, 1, 1)
    return out


if __name__ == "__main__":
    key = jax.random.PRNGKey(0)
    kx, kw, kb, ka = jax.random.split(key, 4)

    # Small example consistent with the module: Conv2d(4 -> 8, k=3, pad=1), bits=[2, 4].
    N, Cin, H, W = 2, 4, 16, 16
    Cout, Kh, Kw = 8, 3, 3
    bits = [2, 4]
    abits = (8,)
    stride, padding = 1, 1

    x = jax.random.normal(kx, (N, Cin, H, W), dtype=jnp.float32)
    weight = 0.3 * jax.random.normal(kw, (Cout, Cin, Kh, Kw), dtype=jnp.float32)
    bias = 0.5 * jax.random.normal(kb, (Cout,), dtype=jnp.float32)
    # alpha_weight selects one precision per output channel; random so both the
    # 2-bit (per-channel exp scale) and 4-bit (pow2-rounded scalar scale) branches run.
    alpha_weight = jax.random.normal(ka, (len(bits), Cout), dtype=jnp.float32)

    # scale_param init, mirroring FQConvWeightQuantization.__init__.
    k_size = Kh * Kw
    std = math.sqrt(2.0 / (Cout * k_size))
    scale_params = []
    for bit in bits:
        n_s = Cout if bit == 2 else 1
        prob = 1.0 / (2 ** bit - 1)
        init = math.log(-2.0 * std * float(ndtri(prob)))
        if bit != 2 and init <= 0.0:
            # round_pow2 path takes log2(scale_param); the module's default init is
            # negative for bit >= 3 (NaN under log2), so use a positive trained-regime
            # value for a meaningful numerical test.
            init = 0.3
        scale_params.append(jnp.full((n_s,), init, dtype=jnp.float32))

    act_scale = jnp.asarray(0.25, dtype=jnp.float32)

    out = quant_multiprec_conv2d(
        x, weight, bias, alpha_weight, scale_params, bits,
        abits=abits, act_scale=act_scale, stride=stride, padding=padding)
    out = jax.block_until_ready(out)

    mix_w, mix_b = _mixed_params_reference(weight, bias, alpha_weight,
                                           scale_params, bits, abits, act_scale)
    ref_exact = _conv_reference(x, mix_w, mix_b, stride, padding)
    # bf16-consistent reference (same operand rounding as the kernel's MXU inputs).
    x_bf = x.astype(jnp.bfloat16).astype(jnp.float32)
    w_bf = mix_w.astype(jnp.bfloat16).astype(jnp.float32)
    ref_bf16 = _conv_reference(x_bf, w_bf, mix_b, stride, padding)

    assert out.shape == (N, Cout, H, W) and out.dtype == jnp.float32
    err_q = float(jnp.max(jnp.abs(out - ref_bf16)))
    err_e = float(jnp.max(jnp.abs(out - ref_exact)))
    assert err_q < 1e-2, f"mismatch vs bf16-consistent reference: max abs err = {err_q}"
    assert err_e < 6e-2, f"mismatch vs exact f32 reference: max abs err = {err_e}"

    print("KERNEL_OK")
</pallas_src>

<mosaic_0001>
module attributes {stable_mosaic.version = 11 : i64} {
  func.func @_fused_quant_conv_kernel(%arg0: i32, %arg1: memref<8x36xf32, #tpu.memory_space<vmem>>, %arg2: memref<8x6xf32, #tpu.memory_space<vmem>>, %arg3: memref<4x512xbf16, #tpu.memory_space<vmem>>, %arg4: memref<4x128xbf16, #tpu.memory_space<vmem>>, %arg5: memref<8x512xf32, #tpu.memory_space<vmem>>) attributes {dimension_semantics = [#tpu.dimension_semantics<parallel>], iteration_bounds = array<i64: 2>, scalar_prefetch = 0 : i64, scratch_operands = 0 : i64, tpu.core_type = #tpu.core_type<tc>, window_params = [{pipeline_mode = #tpu.pipeline_mode<synchronous>, transform_indices = @transform_0, window_bounds = array<i64: 8, 36>}, {pipeline_mode = #tpu.pipeline_mode<synchronous>, transform_indices = @transform_1, window_bounds = array<i64: 8, 6>}, {transform_indices = @transform_2, window_bounds = array<i64: 4, 512>}, {transform_indices = @transform_3, window_bounds = array<i64: 4, 128>}, {transform_indices = @transform_4, window_bounds = array<i64: 8, 512>}]} {
    %c0 = arith.constant 0 : index
    %c0_0 = arith.constant 0 : index
    %0 = vector.load %arg3[%c0, %c0_0] : memref<4x512xbf16, #tpu.memory_space<vmem>>, vector<4x512xbf16>
    %c0_1 = arith.constant 0 : index
    %c0_2 = arith.constant 0 : index
    %1 = vector.load %arg4[%c0_1, %c0_2] : memref<4x128xbf16, #tpu.memory_space<vmem>>, vector<4x128xbf16>
    %2 = tpu.concatenate %0, %1 in 1 : vector<4x512xbf16>, vector<4x128xbf16> -> vector<4x640xbf16>
    %c0_3 = arith.constant 0 : index
    %c0_4 = arith.constant 0 : index
    %3 = vector.load %arg1[%c0_3, %c0_4] : memref<8x36xf32, #tpu.memory_space<vmem>>, vector<8x36xf32>
    %c0_5 = arith.constant 0 : index
    %c0_6 = arith.constant 0 : index
    %4 = vector.load %arg2[%c0_5, %c0_6] : memref<8x6xf32, #tpu.memory_space<vmem>>, vector<8x1xf32>
    %c0_7 = arith.constant 0 : index
    %c1 = arith.constant 1 : index
    %5 = vector.load %arg2[%c0_7, %c1] : memref<8x6xf32, #tpu.memory_space<vmem>>, vector<8x1xf32>
    %c0_8 = arith.constant 0 : index
    %c2 = arith.constant 2 : index
    %6 = vector.load %arg2[%c0_8, %c2] : memref<8x6xf32, #tpu.memory_space<vmem>>, vector<8x1xf32>
    %7 = vector.broadcast %4 : vector<8x1xf32> to vector<8x36xf32>
    %8 = arith.mulf %3, %7 : vector<8x36xf32>
    %cst = arith.constant -1.000000e+00 : f32
    %cst_9 = arith.constant 1.000000e+00 : f32
    %9 = vector.broadcast %cst : f32 to vector<8x36xf32>
    %10 = arith.maximumf %9, %8 : vector<8x36xf32>
    %11 = vector.broadcast %cst_9 : f32 to vector<8x36xf32>
    %12 = arith.minimumf %11, %10 : vector<8x36xf32>
    %13 = vector.broadcast %5 : vector<8x1xf32> to vector<8x36xf32>
    %14 = arith.mulf %12, %13 : vector<8x36xf32>
    %15 = math.roundeven %14 : vector<8x36xf32>
    %16 = vector.broadcast %6 : vector<8x1xf32> to vector<8x36xf32>
    %17 = arith.mulf %15, %16 : vector<8x36xf32>
    %18 = arith.truncf %17 : vector<8x36xf32> to vector<8x36xbf16>
    %c0_10 = arith.constant 0 : index
    %c3 = arith.constant 3 : index
    %19 = vector.load %arg2[%c0_10, %c3] : memref<8x6xf32, #tpu.memory_space<vmem>>, vector<8x1xf32>
    %c0_11 = arith.constant 0 : index
    %c4 = arith.constant 4 : index
    %20 = vector.load %arg2[%c0_11, %c4] : memref<8x6xf32, #tpu.memory_space<vmem>>, vector<8x1xf32>
    %c0_12 = arith.constant 0 : index
    %c5 = arith.constant 5 : index
    %21 = vector.load %arg2[%c0_12, %c5] : memref<8x6xf32, #tpu.memory_space<vmem>>, vector<8x1xf32>
    %22 = arith.mulf %19, %20 : vector<8x1xf32>
    %cst_13 = arith.constant -1.000000e+00 : f32
    %cst_14 = arith.constant 1.000000e+00 : f32
    %23 = vector.broadcast %cst_13 : f32 to vector<8x1xf32>
    %24 = arith.maximumf %23, %22 : vector<8x1xf32>
    %25 = vector.broadcast %cst_14 : f32 to vector<8x1xf32>
    %26 = arith.minimumf %25, %24 : vector<8x1xf32>
    %cst_15 = arith.constant 3.276700e+04 : f32
    %27 = vector.broadcast %cst_15 : f32 to vector<8x1xf32>
    %28 = arith.mulf %26, %27 : vector<8x1xf32>
    %29 = math.roundeven %28 : vector<8x1xf32>
    %30 = arith.mulf %29, %21 : vector<8x1xf32>
    %cst_16 = arith.constant 0.000000e+00 : f32
    %31 = vector.broadcast %cst_16 : f32 to vector<8x512xf32>
    %32 = vector.extract_strided_slice %18 {offsets = [0, 0], sizes = [8, 4], strides = [1, 1]} : vector<8x36xbf16> to vector<8x4xbf16>
    %33 = vector.extract_strided_slice %2 {offsets = [0, 0], sizes = [4, 512], strides = [1, 1]} : vector<4x640xbf16> to vector<4x512xbf16>
    %cst_17 = arith.constant dense<0.000000e+00> : vector<8x512xf32>
    %34 = tpu.matmul %32, %33, %cst_17 {dimension_numbers = #tpu.dot_dimension_numbers<[1], [0], [0], [1], [0, 0, 1, 1], [], []>} : vector<8x4xbf16>, vector<4x512xbf16>, vector<8x512xf32> -> vector<8x512xf32>
    %35 = arith.addf %31, %34 : vector<8x512xf32>
    %36 = vector.extract_strided_slice %18 {offsets = [0, 4], sizes = [8, 4], strides = [1, 1]} : vector<8x36xbf16> to vector<8x4xbf16>
    %37 = vector.extract_strided_slice %2 {offsets = [0, 1], sizes = [4, 512], strides = [1, 1]} : vector<4x640xbf16> to vector<4x512xbf16>
    %cst_18 = arith.constant dense<0.000000e+00> : vector<8x512xf32>
    %38 = tpu.matmul %36, %37, %cst_18 {dimension_numbers = #tpu.dot_dimension_numbers<[1], [0], [0], [1], [0, 0, 1, 1], [], []>} : vector<8x4xbf16>, vector<4x512xbf16>, vector<8x512xf32> -> vector<8x512xf32>
    %39 = arith.addf %35, %38 : vector<8x512xf32>
    %40 = vector.extract_strided_slice %18 {offsets = [0, 8], sizes = [8, 4], strides = [1, 1]} : vector<8x36xbf16> to vector<8x4xbf16>
    %41 = vector.extract_strided_slice %2 {offsets = [0, 2], sizes = [4, 512], strides = [1, 1]} : vector<4x640xbf16> to vector<4x512xbf16>
    %cst_19 = arith.constant dense<0.000000e+00> : vector<8x512xf32>
    %42 = tpu.matmul %40, %41, %cst_19 {dimension_numbers = #tpu.dot_dimension_numbers<[1], [0], [0], [1], [0, 0, 1, 1], [], []>} : vector<8x4xbf16>, vector<4x512xbf16>, vector<8x512xf32> -> vector<8x512xf32>
    %43 = arith.addf %39, %42 : vector<8x512xf32>
    %44 = vector.extract_strided_slice %18 {offsets = [0, 12], sizes = [8, 4], strides = [1, 1]} : vector<8x36xbf16> to vector<8x4xbf16>
    %45 = vector.extract_strided_slice %2 {offsets = [0, 18], sizes = [4, 512], strides = [1, 1]} : vector<4x640xbf16> to vector<4x512xbf16>
    %cst_20 = arith.constant dense<0.000000e+00> : vector<8x512xf32>
    %46 = tpu.matmul %44, %45, %cst_20 {dimension_numbers = #tpu.dot_dimension_numbers<[1], [0], [0], [1], [0, 0, 1, 1], [], []>} : vector<8x4xbf16>, vector<4x512xbf16>, vector<8x512xf32> -> vector<8x512xf32>
    %47 = arith.addf %43, %46 : vector<8x512xf32>
    %48 = vector.extract_strided_slice %18 {offsets = [0, 16], sizes = [8, 4], strides = [1, 1]} : vector<8x36xbf16> to vector<8x4xbf16>
    %49 = vector.extract_strided_slice %2 {offsets = [0, 19], sizes = [4, 512], strides = [1, 1]} : vector<4x640xbf16> to vector<4x512xbf16>
    %cst_21 = arith.constant dense<0.000000e+00> : vector<8x512xf32>
    %50 = tpu.matmul %48, %49, %cst_21 {dimension_numbers = #tpu.dot_dimension_numbers<[1], [0], [0], [1], [0, 0, 1, 1], [], []>} : vector<8x4xbf16>, vector<4x512xbf16>, vector<8x512xf32> -> vector<8x512xf32>
    %51 = arith.addf %47, %50 : vector<8x512xf32>
    %52 = vector.extract_strided_slice %18 {offsets = [0, 20], sizes = [8, 4], strides = [1, 1]} : vector<8x36xbf16> to vector<8x4xbf16>
    %53 = vector.extract_strided_slice %2 {offsets = [0, 20], sizes = [4, 512], strides = [1, 1]} : vector<4x640xbf16> to vector<4x512xbf16>
    %cst_22 = arith.constant dense<0.000000e+00> : vector<8x512xf32>
    %54 = tpu.matmul %52, %53, %cst_22 {dimension_numbers = #tpu.dot_dimension_numbers<[1], [0], [0], [1], [0, 0, 1, 1], [], []>} : vector<8x4xbf16>, vector<4x512xbf16>, vector<8x512xf32> -> vector<8x512xf32>
    %55 = arith.addf %51, %54 : vector<8x512xf32>
    %56 = vector.extract_strided_slice %18 {offsets = [0, 24], sizes = [8, 4], strides = [1, 1]} : vector<8x36xbf16> to vector<8x4xbf16>
    %57 = vector.extract_strided_slice %2 {offsets = [0, 36], sizes = [4, 512], strides = [1, 1]} : vector<4x640xbf16> to vector<4x512xbf16>
    %cst_23 = arith.constant dense<0.000000e+00> : vector<8x512xf32>
    %58 = tpu.matmul %56, %57, %cst_23 {dimension_numbers = #tpu.dot_dimension_numbers<[1], [0], [0], [1], [0, 0, 1, 1], [], []>} : vector<8x4xbf16>, vector<4x512xbf16>, vector<8x512xf32> -> vector<8x512xf32>
    %59 = arith.addf %55, %58 : vector<8x512xf32>
    %60 = vector.extract_strided_slice %18 {offsets = [0, 28], sizes = [8, 4], strides = [1, 1]} : vector<8x36xbf16> to vector<8x4xbf16>
    %61 = vector.extract_strided_slice %2 {offsets = [0, 37], sizes = [4, 512], strides = [1, 1]} : vector<4x640xbf16> to vector<4x512xbf16>
    %cst_24 = arith.constant dense<0.000000e+00> : vector<8x512xf32>
    %62 = tpu.matmul %60, %61, %cst_24 {dimension_numbers = #tpu.dot_dimension_numbers<[1], [0], [0], [1], [0, 0, 1, 1], [], []>} : vector<8x4xbf16>, vector<4x512xbf16>, vector<8x512xf32> -> vector<8x512xf32>
    %63 = arith.addf %59, %62 : vector<8x512xf32>
    %64 = vector.extract_strided_slice %18 {offsets = [0, 32], sizes = [8, 4], strides = [1, 1]} : vector<8x36xbf16> to vector<8x4xbf16>
    %65 = vector.extract_strided_slice %2 {offsets = [0, 38], sizes = [4, 512], strides = [1, 1]} : vector<4x640xbf16> to vector<4x512xbf16>
    %cst_25 = arith.constant dense<0.000000e+00> : vector<8x512xf32>
    %66 = tpu.matmul %64, %65, %cst_25 {dimension_numbers = #tpu.dot_dimension_numbers<[1], [0], [0], [1], [0, 0, 1, 1], [], []>} : vector<8x4xbf16>, vector<4x512xbf16>, vector<8x512xf32> -> vector<8x512xf32>
    %67 = arith.addf %63, %66 : vector<8x512xf32>
    %68 = vector.broadcast %30 : vector<8x1xf32> to vector<8x512xf32>
    %69 = arith.addf %67, %68 : vector<8x512xf32>
    %c0_26 = arith.constant 0 : index
    %c0_27 = arith.constant 0 : index
    %70 = vector.load %arg5[%c0_26, %c0_27] : memref<8x512xf32, #tpu.memory_space<vmem>>, vector<8x512xf32>
    tpu.vector_store %arg5[%c0_26, %c0_27], %69 {strides = array<i32>} : memref<8x512xf32, #tpu.memory_space<vmem>>, vector<8x512xf32>,
    return
  }
  func.func @transform_0(%arg0: i32) -> (i32, i32) {
    %c0_i32 = arith.constant 0 : i32
    %c0_i32_0 = arith.constant 0 : i32
    %c0_i32_1 = arith.constant 0 : i32
    return %c0_i32, %c0_i32_0 : i32, i32
  }
  func.func @transform_1(%arg0: i32) -> (i32, i32) {
    %c0_i32 = arith.constant 0 : i32
    %c0_i32_0 = arith.constant 0 : i32
    %c0_i32_1 = arith.constant 0 : i32
    return %c0_i32, %c0_i32_0 : i32, i32
  }
  func.func @transform_2(%arg0: i32) -> (i32, i32) {
    %c0_i32 = arith.constant 0 : i32
    %c0_i32_0 = arith.constant 0 : i32
    return %c0_i32, %arg0 : i32, i32
  }
  func.func @transform_3(%arg0: i32) -> (i32, i32) {
    %c1_i32 = arith.constant 1 : i32
    %0 = arith.addi %arg0, %c1_i32 : i32
    %c4_i32 = arith.constant 4 : i32
    %1 = arith.muli %0, %c4_i32 : i32
    %c0_i32 = arith.constant 0 : i32
    %c0_i32_0 = arith.constant 0 : i32
    return %c0_i32, %1 : i32, i32
  }
  func.func @transform_4(%arg0: i32) -> (i32, i32) {
    %c0_i32 = arith.constant 0 : i32
    %c0_i32_0 = arith.constant 0 : i32
    return %c0_i32, %arg0 : i32, i32
  }
}

</mosaic_0001>

<llo_original>
// kernel: tpu_custom_call.1
$region0: #{tpu_custom_call.1}
  #allocation0 [shape = 'u32[]', space=smem, size = 0x4, offset = 0x4, fixed_abs, tag = 'smem constant byte address 0x4 - core index']
  #allocation1 [shape = 'u32[72,128]{1,0:T(1,128)}', space=vmem, size = 0x9000, scoped, tag = 'internal scratch']
  %s0 = inlined_call_operand.hbm [shape: f32[8,36], index: 0, kind: input, shape index: {}]
  %s1 = inlined_call_operand.hbm [shape: f32[8,6], index: 1, kind: input, shape index: {}]
  %s2 = inlined_call_operand.hbm [shape: bf16[4,1536], index: 2, kind: input, shape index: {}]
  %s3 = inlined_call_operand.hbm [shape: bf16[4,1536], index: 3, kind: input, shape index: {}]
  %s4 = inlined_call_operand.hbm [shape: f32[8,1024], index: 4, kind: output, shape index: {}]
  %s5 = sld [smem:[#allocation0]]
  $region65: #{tpu_custom_call.1} parent=0
    _
  %s7 = ssub.s32 1, %s5
  %s8 = scalar_select 0, %s7, %s5
  $region1: #{tpu_custom_call.1} parent=0
    #allocation2 [shape = 'u8[4096]{0}', space=vmem, size = 0x1000, scoped, tag = 'input window, operand 0, single buffered']
    #allocation3 [shape = 's32[2]{0}', space=sflag, size = 0x8, scoped, tag = 'scoped memory for tpu_custom_call.1']
    #allocation4 [shape = 's32[2]{0}', space=sflag, size = 0x8, scoped, tag = 'scoped memory for tpu_custom_call.1']
    #allocation5 [shape = 'u8[4096]{0}', space=vmem, size = 0x1000, scoped, tag = 'input window, operand 1, single buffered']
    #allocation6 [shape = 's32[1]{0}', space=sflag, size = 0x4, scoped, tag = 'scoped memory for tpu_custom_call.1']
    #allocation7 [shape = 'u8[8192]{0}', space=vmem, size = 0x2000, scoped, tag = 'input window, operand 2']
    #allocation8 [shape = 'u8[2048]{0}', space=vmem, size = 0x800, scoped, tag = 'input window, operand 3']
    #allocation9 [shape = 'u8[32768]{0}', space=vmem, size = 0x8000, scoped, tag = 'output window, operand 0']
    %9 = vsyncpa [#allocation3], 0
    %10 = vsyncpa [#allocation6], 0
    %11 = vsyncpa [#allocation4], 0
    %s12 = scalar_lea.sflag [#allocation4], 1
    %13 = vsyncpa %s12, 0
    loop: start=0, step=1, limit=4
    $region2: #{tpu_custom_call.1} parent=1 // loop_pre_header
      _
    $region3: #{tpu_custom_call.1} parent=1 // loop_header
      %s15 = sphi 0, %s19
      %p16 = scmp.ge.s32.totalorder %s15, 4
      %s23 = sphi 0, %s23
      %s25 = sphi 0, %s23
      %s26 = sphi 0, %s25
      %s40 = sphi 0, %s26
      %s44 = sphi 0, %s44
      %s46 = sphi 0, %s44
      %s47 = sphi 0, %s46
      %s61 = sphi 0, %s47
      %s67 = sphi 0, %s69
      %s70 = sphi 0, %s67
      %s71 = sphi 0, %s70
      %s87 = sphi 0, %s71
      %s97 = sphi 0, %s99
      %s100 = sphi 0, %s97
      %s101 = sphi 0, %s100
      %s117 = sphi 0, %s101
      %s123 = sphi 0, %s125
      %s126 = sphi 0, %s123
      %s127 = sphi 0, %s126
      %s143 = sphi 0, %s127
    $region4: #{tpu_custom_call.1} parent=1 // loop_header_branch
      %18 = sbr.rel (%p16) target = $region8
    $region5: #{tpu_custom_call.1} parent=1 // loop_body
      %s20 = ssub.s32 %s15, 1
      %s21 = ssub.s32 %s15, 2
      %s22 = sadd.s32 %s15, 1
      %s24 = sadd.s32 %s23, 1
      %p27 = scmp.eq.s32.totalorder %s15, 1
      %p28 = scmp.ne.s32.totalorder %s23, %s25
      %p29 = scmp.eq.s32.totalorder %s15, 0
      %p30 = por %p28, %p29
      %p31 = scmp.ne.s32.totalorder %s23, %s25
      %p32 = scmp.eq.s32.totalorder %s20, 1
      %p33 = por %p31, %p32
      %p34 = scmp.ne.s32.totalorder %s25, %s26
      %p35 = scmp.eq.s32.totalorder %s20, 0
      %p36 = por %p34, %p35
      %p37 = scmp.ne.s32.totalorder %s25, %s26
      %p38 = scmp.eq.s32.totalorder %s21, 1
      %p39 = por %p37, %p38
      %p41 = scmp.ne.s32.totalorder %s26, %s40
      %p42 = scmp.eq.s32.totalorder %s21, 0
      %p43 = por %p41, %p42
      %s45 = sadd.s32 %s44, 1
      %p48 = scmp.eq.s32.totalorder %s15, 1
      %p49 = scmp.ne.s32.totalorder %s44, %s46
      %p50 = scmp.eq.s32.totalorder %s15, 0
      %p51 = por %p49, %p50
      %p52 = scmp.ne.s32.totalorder %s44, %s46
      %p53 = scmp.eq.s32.totalorder %s20, 1
      %p54 = por %p52, %p53
      %p55 = scmp.ne.s32.totalorder %s46, %s47
      %p56 = scmp.eq.s32.totalorder %s20, 0
      %p57 = por %p55, %p56
      %p58 = scmp.ne.s32.totalorder %s46, %s47
      %p59 = scmp.eq.s32.totalorder %s21, 1
      %p60 = por %p58, %p59
      %p62 = scmp.ne.s32.totalorder %s47, %s61
      %p63 = scmp.eq.s32.totalorder %s21, 0
      %p64 = por %p62, %p63
      %s65 = ssub.s32 %s15, %s22
      %p66 = scmp.eq.s32.totalorder %s65, 0
      %s68 = sadd.s32 %s67, 1
      %s69 = scalar_select %p66, %s67, %s68
      %p72 = pneg %p66
      %p73 = scmp.eq.s32.totalorder %s15, 1
      %p74 = por %p72, %p73
      %p75 = scmp.ne.s32.totalorder %s67, %s70
      %p76 = scmp.eq.s32.totalorder %s15, 0
      %p77 = por %p75, %p76
      %p78 = scmp.ne.s32.totalorder %s67, %s70
      %p79 = scmp.eq.s32.totalorder %s20, 1
      %p80 = por %p78, %p79
      %p81 = scmp.ne.s32.totalorder %s70, %s71
      %p82 = scmp.eq.s32.totalorder %s20, 0
      %p83 = por %p81, %p82
      %p84 = scmp.ne.s32.totalorder %s70, %s71
      %p85 = scmp.eq.s32.totalorder %s21, 1
      %p86 = por %p84, %p85
      %p88 = scmp.ne.s32.totalorder %s71, %s87
      %p89 = scmp.eq.s32.totalorder %s21, 0
      %p90 = por %p88, %p89
      %s91 = sadd.s32 %s15, 1
      %s92 = smul.u32 %s91, 4
      %s93 = sadd.s32 %s22, 1
      %s94 = smul.u32 %s93, 4
      %s95 = ssub.s32 %s92, %s94
      %p96 = scmp.eq.s32.totalorder %s95, 0
      %s98 = sadd.s32 %s97, 1
      %s99 = scalar_select %p96, %s97, %s98
      %p102 = pneg %p96
      %p103 = scmp.eq.s32.totalorder %s15, 1
      %p104 = por %p102, %p103
      %p105 = scmp.ne.s32.totalorder %s97, %s100
      %p106 = scmp.eq.s32.totalorder %s15, 0
      %p107 = por %p105, %p106
      %p108 = scmp.ne.s32.totalorder %s97, %s100
      %p109 = scmp.eq.s32.totalorder %s20, 1
      %p110 = por %p108, %p109
      %p111 = scmp.ne.s32.totalorder %s100, %s101
      %p112 = scmp.eq.s32.totalorder %s20, 0
      %p113 = por %p111, %p112
      %p114 = scmp.ne.s32.totalorder %s100, %s101
      %p115 = scmp.eq.s32.totalorder %s21, 1
      %p116 = por %p114, %p115
      %p118 = scmp.ne.s32.totalorder %s101, %s117
      %p119 = scmp.eq.s32.totalorder %s21, 0
      %p120 = por %p118, %p119
      %s121 = ssub.s32 %s15, %s22
      %p122 = scmp.eq.s32.totalorder %s121, 0
      %s124 = sadd.s32 %s123, 1
      %s125 = scalar_select %p122, %s123, %s124
      %p128 = pneg %p122
      %p129 = scmp.eq.s32.totalorder %s15, 1
      %p130 = por %p128, %p129
      %p131 = scmp.ne.s32.totalorder %s123, %s126
      %p132 = scmp.eq.s32.totalorder %s15, 0
      %p133 = por %p131, %p132
      %p134 = scmp.ne.s32.totalorder %s123, %s126
      %p135 = scmp.eq.s32.totalorder %s20, 1
      %p136 = por %p134, %p135
      %p137 = scmp.ne.s32.totalorder %s126, %s127
      %p138 = scmp.eq.s32.totalorder %s20, 0
      %p139 = por %p137, %p138
      %p140 = scmp.ne.s32.totalorder %s126, %s127
      %p141 = scmp.eq.s32.totalorder %s21, 1
      %p142 = por %p140, %p141
      %p144 = scmp.ne.s32.totalorder %s127, %s143
      %p145 = scmp.eq.s32.totalorder %s21, 0
      %p146 = por %p144, %p145
      %p147 = scmp.le.s32.totalorder 1, %s15
      %p148 = scmp.lt.s32.totalorder %s15, 3
      %p149 = pnand %p147, %p148
      %p150 = pneg %p149
      // Predicated region
      $region9: #{tpu_custom_call.1} parent=5 // pred_check
        _
      $region10: #{tpu_custom_call.1} parent=5 // pred_check_branch
        %152 = sbr.rel (%p149) target = $region12
      $region11: #{tpu_custom_call.1} parent=5 // pred_region
        %s153 = ssub.s32 %s15, 1
        // Predicated region
        $region13: #{tpu_custom_call.1} parent=11 // pred_check
          %p154 = pneg %p36
        $region14: #{tpu_custom_call.1} parent=11 // pred_check_branch
          %156 = sbr.rel (%p154) target = $region16
        $region15: #{tpu_custom_call.1} parent=11 // pred_region
          %158 = vsyncadd [#allocation3], 0
          %s160 = sshll.u32 %s0, 4
          %s161 = int_to_ptr.hbm [resolvable:$true] %s160
          %s162 = sshll.u32 [#allocation2], 4
          %s163 = int_to_ptr.vmem [resolvable:$true] %s162
          %165 = dma.hbm_to_vmem [thread:$0]  %s161, 128, %s163, [#allocation3]
        $region16: #{tpu_custom_call.1} parent=11 // pred_fallthru
          _
        // Predicated region
        $region17: #{tpu_custom_call.1} parent=11 // pred_check
          %p166 = pneg %p57
        $region18: #{tpu_custom_call.1} parent=11 // pred_check_branch
          %168 = sbr.rel (%p166) target = $region20
        $region19: #{tpu_custom_call.1} parent=11 // pred_region
          %170 = vsyncadd [#allocation6], 0
          %s172 = sshll.u32 %s1, 4
          %s173 = int_to_ptr.hbm [resolvable:$true] %s172
          %s174 = sshll.u32 [#allocation5], 4
          %s175 = int_to_ptr.vmem [resolvable:$true] %s174
          %177 = dma.hbm_to_vmem [thread:$0]  %s173, 128, %s175, [#allocation6]
        $region20: #{tpu_custom_call.1} parent=11 // pred_fallthru
          _
      $region12: #{tpu_custom_call.1} parent=5 // pred_fallthru
        _
      %p178 = scmp.lt.s32.totalorder %s15, 2
      // Predicated region
      $region21: #{tpu_custom_call.1} parent=5 // pred_check
        %p179 = pneg %p178
      $region22: #{tpu_custom_call.1} parent=5 // pred_check_branch
        %181 = sbr.rel (%p179) target = $region24
      $region23: #{tpu_custom_call.1} parent=5 // pred_region
        // Predicated region
        $region25: #{tpu_custom_call.1} parent=23 // pred_check
          %p182 = pneg %p77
        $region26: #{tpu_custom_call.1} parent=23 // pred_check_branch
          %184 = sbr.rel (%p182) target = $region28
        $region27: #{tpu_custom_call.1} parent=23 // pred_region
          %s185 = sand.u32 %s15, 1
          %s186 = scalar_lea.sflag [#allocation3], %s185
          %s187 = sand.u32 %s67, 1
          %s188 = smul.addr %s187, 8
          %s189 = scalar_lea.vmem [#allocation7], %s188
          %s190 = smul.u32 4, %s15
          %192 = vsyncadd %s186, 0
          %s193 = smul.addr %s190, 2
          %s194 = scalar_lea.hbm %s2, %s193
          %s196 = sshll.u32 %s194, 4
          %s197 = int_to_ptr.hbm [resolvable:$true] %s196
          %s198 = sshll.u32 %s189, 4
          %s199 = int_to_ptr.vmem [resolvable:$true] %s198
          %201 = dma.hbm_to_vmem [thread:$0]  %s197, 128, %s199, %s186
        $region28: #{tpu_custom_call.1} parent=23 // pred_fallthru
          _
        // Predicated region
        $region29: #{tpu_custom_call.1} parent=23 // pred_check
          %p202 = pneg %p107
        $region30: #{tpu_custom_call.1} parent=23 // pred_check_branch
          %204 = sbr.rel (%p202) target = $region32
        $region31: #{tpu_custom_call.1} parent=23 // pred_region
          %s205 = sand.u32 %s15, 1
          %s206 = scalar_lea.sflag [#allocation3], %s205
          %s207 = sand.u32 %s97, 1
          %s208 = smul.addr %s207, 2
          %s209 = scalar_lea.vmem [#allocation8], %s208
          %s210 = sadd.s32 %s15, 1
          %s211 = smul.u32 %s210, 4
          %213 = vsyncadd %s206, 0
          %s214 = smul.addr %s211, 2
          %s215 = scalar_lea.hbm %s3, %s214
          %s217 = sshll.u32 %s215, 4
          %s218 = int_to_ptr.hbm [resolvable:$true] %s217
          %s219 = sshll.u32 %s209, 4
          %s220 = int_to_ptr.vmem [resolvable:$true] %s219
          %222 = dma.hbm_to_vmem [thread:$0]  %s218, 32, %s220, %s206
        $region32: #{tpu_custom_call.1} parent=23 // pred_fallthru
          _
      $region24: #{tpu_custom_call.1} parent=5 // pred_fallthru
        _
      %p223 = scmp.le.s32.totalorder 1, %s15
      %p224 = scmp.lt.s32.totalorder %s15, 3
      %p225 = pnand %p223, %p224
      %p226 = pneg %p225
      // Predicated region
      $region33: #{tpu_custom_call.1} parent=5 // pred_check
        _
      $region34: #{tpu_custom_call.1} parent=5 // pred_check_branch
        %228 = sbr.rel (%p225) target = $region36
      $region35: #{tpu_custom_call.1} parent=5 // pred_region
        %s229 = ssub.s32 %s15, 1
        // Predicated region
        $region37: #{tpu_custom_call.1} parent=35 // pred_check
          %p230 = pneg %p36
        $region38: #{tpu_custom_call.1} parent=35 // pred_check_branch
          %232 = sbr.rel (%p230) target = $region40
        $region39: #{tpu_custom_call.1} parent=35 // pred_region
          %234 = dma.done [#allocation3], 128
        $region40: #{tpu_custom_call.1} parent=35 // pred_fallthru
          _
        // Predicated region
        $region41: #{tpu_custom_call.1} parent=35 // pred_check
          %p235 = pneg %p57
        $region42: #{tpu_custom_call.1} parent=35 // pred_check_branch
          %237 = sbr.rel (%p235) target = $region44
        $region43: #{tpu_custom_call.1} parent=35 // pred_region
          %239 = dma.done [#allocation6], 128
        $region44: #{tpu_custom_call.1} parent=35 // pred_fallthru
          _
        %s240 = sand.u32 %s20, 1
        %s241 = scalar_lea.sflag [#allocation3], %s240
        %s242 = sand.u32 %s70, 1
        %s243 = smul.addr %s242, 8
        %s244 = scalar_lea.vmem [#allocation7], %s243
        // Predicated region
        $region45: #{tpu_custom_call.1} parent=35 // pred_check
          %p245 = pneg %p83
        $region46: #{tpu_custom_call.1} parent=35 // pred_check_branch
          %247 = sbr.rel (%p245) target = $region48
        $region47: #{tpu_custom_call.1} parent=35 // pred_region
          %249 = dma.done %s241, 128
        $region48: #{tpu_custom_call.1} parent=35 // pred_fallthru
          _
        %s250 = sand.u32 %s20, 1
        %s251 = scalar_lea.sflag [#allocation3], %s250
        %s252 = sand.u32 %s100, 1
        %s253 = smul.addr %s252, 2
        %s254 = scalar_lea.vmem [#allocation8], %s253
        // Predicated region
        $region49: #{tpu_custom_call.1} parent=35 // pred_check
          %p255 = pneg %p113
        $region50: #{tpu_custom_call.1} parent=35 // pred_check_branch
          %257 = sbr.rel (%p255) target = $region52
        $region51: #{tpu_custom_call.1} parent=35 // pred_region
          %259 = dma.done %s251, 32
        $region52: #{tpu_custom_call.1} parent=35 // pred_fallthru
          _
        %p260 = pneg %p36
        %p261 = pneg %p33
        %p262 = pneg %p57
        %p263 = pneg %p54
        %s264 = sand.u32 %s20, 1
        %s265 = scalar_lea.sflag [#allocation3], %s264
        %s266 = sand.u32 %s70, 1
        %s267 = smul.addr %s266, 8
        %s268 = scalar_lea.vmem [#allocation7], %s267
        %p269 = pneg %p83
        %p270 = pneg %p80
        %s271 = sand.u32 %s20, 1
        %s272 = scalar_lea.sflag [#allocation3], %s271
        %s273 = sand.u32 %s100, 1
        %s274 = smul.addr %s273, 2
        %s275 = scalar_lea.vmem [#allocation8], %s274
        %p276 = pneg %p113
        %p277 = pneg %p110
        %p278 = pneg %p139
        %p279 = pneg %p136
        %s280 = sand.u32 %s126, 1
        %s281 = scalar_lea.sflag [#allocation4], %s280
        %s282 = sand.u32 %s126, 1
        %s283 = smul.addr %s282, 32
        %s284 = scalar_lea.vmem [#allocation9], %s283
        %s285 = smul.u32 4, %s20
        %s286 = sadd.s32 %s20, 1
        %s287 = smul.u32 %s286, 4
        %s288 = smul.u32 4, %s20
        %v290 = vld [vmem:[%s244] sm:$0xff]
        %v291 = vld [vmem:[%s254] sm:$0x3]
        %293 = vst [vmem:[#allocation1] ss:$4 sm:$0xff] %v290
        %v294 = vld.sshfl [vmem:[#allocation1] sm:$0xff pattern:$0x73625140]
        %v296 = vld.sshfl [vmem:[#allocation1 + $0x8] sm:$0xff pattern:$0x73625140]
        %v298 = vld.sshfl [vmem:[#allocation1 + $0x10] sm:$0xff pattern:$0x73625140]
        %v300 = vld.sshfl [vmem:[#allocation1 + $0x18] sm:$0xff pattern:$0x73625140]
        %v302 = vld [vmem:[#allocation2] sm:$0xff]
        %v303 = vld [vmem:[#allocation5] sm:$0xff]
        %305 = vset.pattern.permute.xlu0 0
        %306 = vperm.xlu0 %305, %v303
        %v307 = vpop.permute.xlu0 %306
        %v309 = vmul.f32 %v302, %v307
        %v310 = vmax.f32 %v309, -1.0
        %v311 = vmin.f32 %v310, 1.0
        %312 = vset.pattern.permute.xlu0 1
        %313 = vperm.xlu0 %312, %v303
        %v314 = vpop.permute.xlu0 %313
        %v316 = vmul.f32 %v311, %v314
        %v317 = vround.ne.pseudo %v316
        %318 = vset.pattern.permute.xlu0 2
        %319 = vperm.xlu0 %318, %v303
        %v320 = vpop.permute.xlu0 %319
        %v322 = vmul.f32 %v317, %v320
        %v323 = vpack.c.bf16 %v322, %v322
        %324 = vrot.lane.b32.xlu0 %v303, 127
        %v325 = vpop.permute.xlu0 %324
        %v327 = vmul.f32 %v303, %v325
        %v328 = vmax.f32 %v327, -1.0
        %v329 = vmin.f32 %v328, 1.0
        %v330 = vmul.f32 %v329, 32767.0
        %v331 = vround.ne.pseudo %v330
        %332 = vrot.lane.b32.xlu0 %v303, 126
        %v333 = vpop.permute.xlu0 %332
        %v335 = vmul.f32 %v331, %v333
        %v337 = vunpack.c.l.b16 %v323
        %v338 = vpack.c.b16 %v337, %v337
        %339 = vrot.lane.b32.xlu0 %v338, 124
        %v340 = vpop.permute.xlu0 %339
        %342 = vrot.lane.b32.xlu0 %v294, 127
        %v343 = vpop.permute.xlu0 %342
        %344 = vrot.lane.b32.xlu0 %v296, 127
        %v345 = vpop.permute.xlu0 %344
        %346 = vrot.lane.b32.xlu0 %v298, 127
        %v347 = vpop.permute.xlu0 %346
        %348 = vrot.lane.b32.xlu0 %v300, 127
        %v349 = vpop.permute.xlu0 %348
        %350 = vrot.lane.b32.xlu0 %v291, 127
        %v351 = vpop.permute.xlu0 %350
        %vm352 = vcmask 1039360
        %v353 = vsel %vm352, %v343, %v345
        %v354 = vsel %vm352, %v345, %v347
        %v355 = vsel %vm352, %v347, %v349
        %v356 = vsel %vm352, %v349, %v351
        %vm357 = vcmask 31744
        %v359 = vsel %vm357, %v340, 0
        %vm361 = vcmask 1041408
        %v363 = vsel %vm361, %v353, 0
        %v366 = vsel %vm361, %v354, 0
        %v369 = vsel %vm361, %v355, 0
        %v372 = vsel %vm361, %v356, 0
        %374 = vmatpush.bf16.msra.mxu0 0
        %375 = vmatpush.bf16.msra.mxu0 0
        %376 = vmatpush.bf16.msra.mxu0 0
        %377 = vmatpush.bf16.msra.mxu0 0
        %378 = vmatpush.bf16.msra.mxu0 0
        %379 = vmatpush.bf16.msra.mxu0 0
        %380 = vmatpush.bf16.msra.mxu0 0
        %381 = vmatpush.bf16.msra.mxu0 %v363
        %382 = vmatmul.bf16.gmra.mxu0 %v359
        %v383 = vpop.f32.mrf.mxu0
        %v384 = vadd.f32 0.0, %v383
        %v385 = vpop.f32.mrf.mxu0
        %386 = vdwg.mxu0
        %387 = vmatpush.bf16.msra.mxu0 0
        %388 = vmatpush.bf16.msra.mxu0 0
        %389 = vmatpush.bf16.msra.mxu0 0
        %390 = vmatpush.bf16.msra.mxu0 0
        %391 = vmatpush.bf16.msra.mxu0 0
        %392 = vmatpush.bf16.msra.mxu0 0
        %393 = vmatpush.bf16.msra.mxu0 0
        %394 = vmatpush.bf16.msra.mxu0 %v366
        %395 = vmatmul.bf16.gmra.mxu0 %v359
        %v396 = vpop.f32.mrf.mxu0
        %v397 = vadd.f32 0.0, %v396
        %v398 = vpop.f32.mrf.mxu0
        %399 = vdwg.mxu0
        %400 = vmatpush.bf16.msra.mxu0 0
        %401 = vmatpush.bf16.msra.mxu0 0
        %402 = vmatpush.bf16.msra.mxu0 0
        %403 = vmatpush.bf16.msra.mxu0 0
        %404 = vmatpush.bf16.msra.mxu0 0
        %405 = vmatpush.bf16.msra.mxu0 0
        %406 = vmatpush.bf16.msra.mxu0 0
        %407 = vmatpush.bf16.msra.mxu0 %v369
        %408 = vmatmul.bf16.gmra.mxu0 %v359
        %v409 = vpop.f32.mrf.mxu0
        %v410 = vadd.f32 0.0, %v409
        %v411 = vpop.f32.mrf.mxu0
        %412 = vdwg.mxu0
        %413 = vmatpush.bf16.msra.mxu0 0
        %414 = vmatpush.bf16.msra.mxu0 0
        %415 = vmatpush.bf16.msra.mxu0 0
        %416 = vmatpush.bf16.msra.mxu0 0
        %417 = vmatpush.bf16.msra.mxu0 0
        %418 = vmatpush.bf16.msra.mxu0 0
        %419 = vmatpush.bf16.msra.mxu0 0
        %420 = vmatpush.bf16.msra.mxu0 %v372
        %421 = vmatmul.bf16.gmra.mxu0 %v359
        %v422 = vpop.f32.mrf.mxu0
        %v423 = vadd.f32 0.0, %v422
        %v424 = vpop.f32.mrf.mxu0
        %425 = vdwg.mxu0
        %v427 = vsel %vm357, %v323, 0
        %v429 = vsel %vm361, %v294, 0
        %v431 = vsel %vm361, %v296, 0
        %v433 = vsel %vm361, %v298, 0
        %v435 = vsel %vm361, %v300, 0
        %437 = vmatpush.bf16.msra.mxu0 0
        %438 = vmatpush.bf16.msra.mxu0 0
        %439 = vmatpush.bf16.msra.mxu0 0
        %440 = vmatpush.bf16.msra.mxu0 0
        %441 = vmatpush.bf16.msra.mxu0 0
        %442 = vmatpush.bf16.msra.mxu0 0
        %443 = vmatpush.bf16.msra.mxu0 0
        %444 = vmatpush.bf16.msra.mxu0 %v429
        %445 = vmatmul.bf16.gmra.mxu0 %v427
        %v446 = vpop.f32.mrf.mxu0
        %v447 = vadd.f32 %v384, %v446
        %v448 = vpop.f32.mrf.mxu0
        %449 = vdwg.mxu0
        %450 = vmatpush.bf16.msra.mxu0 0
        %451 = vmatpush.bf16.msra.mxu0 0
        %452 = vmatpush.bf16.msra.mxu0 0
        %453 = vmatpush.bf16.msra.mxu0 0
        %454 = vmatpush.bf16.msra.mxu0 0
        %455 = vmatpush.bf16.msra.mxu0 0
        %456 = vmatpush.bf16.msra.mxu0 0
        %457 = vmatpush.bf16.msra.mxu0 %v431
        %458 = vmatmul.bf16.gmra.mxu0 %v427
        %v459 = vpop.f32.mrf.mxu0
        %v460 = vadd.f32 %v397, %v459
        %v461 = vpop.f32.mrf.mxu0
        %462 = vdwg.mxu0
        %463 = vmatpush.bf16.msra.mxu0 0
        %464 = vmatpush.bf16.msra.mxu0 0
        %465 = vmatpush.bf16.msra.mxu0 0
        %466 = vmatpush.bf16.msra.mxu0 0
        %467 = vmatpush.bf16.msra.mxu0 0
        %468 = vmatpush.bf16.msra.mxu0 0
        %469 = vmatpush.bf16.msra.mxu0 0
        %470 = vmatpush.bf16.msra.mxu0 %v433
        %471 = vmatmul.bf16.gmra.mxu0 %v427
        %v472 = vpop.f32.mrf.mxu0
        %v473 = vadd.f32 %v410, %v472
        %v474 = vpop.f32.mrf.mxu0
        %475 = vdwg.mxu0
        %476 = vmatpush.bf16.msra.mxu0 0
        %477 = vmatpush.bf16.msra.mxu0 0
        %478 = vmatpush.bf16.msra.mxu0 0
        %479 = vmatpush.bf16.msra.mxu0 0
        %480 = vmatpush.bf16.msra.mxu0 0
        %481 = vmatpush.bf16.msra.mxu0 0
        %482 = vmatpush.bf16.msra.mxu0 0
        %483 = vmatpush.bf16.msra.mxu0 %v435
        %484 = vmatmul.bf16.gmra.mxu0 %v427
        %v485 = vpop.f32.mrf.mxu0
        %v486 = vadd.f32 %v423, %v485
        %v487 = vpop.f32.mrf.mxu0
        %488 = vdwg.mxu0
        %489 = vrot.lane.b32.xlu0 %v338, 120
        %v490 = vpop.permute.xlu0 %489
        %491 = vrot.lane.b32.xlu0 %v294, 126
        %v492 = vpop.permute.xlu0 %491
        %493 = vrot.lane.b32.xlu0 %v296, 126
        %v494 = vpop.permute.xlu0 %493
        %495 = vrot.lane.b32.xlu0 %v298, 126
        %v496 = vpop.permute.xlu0 %495
        %497 = vrot.lane.b32.xlu0 %v300, 126
        %v498 = vpop.permute.xlu0 %497
        %499 = vrot.lane.b32.xlu0 %v291, 126
        %v500 = vpop.permute.xlu0 %499
        %vm501 = vcmask 1031168
        %v502 = vsel %vm501, %v492, %v494
        %v503 = vsel %vm501, %v494, %v496
        %v504 = vsel %vm501, %v496, %v498
        %v505 = vsel %vm501, %v498, %v500
        %v507 = vsel %vm357, %v490, 0
        %v510 = vsel %vm361, %v502, 0
        %v513 = vsel %vm361, %v503, 0
        %v516 = vsel %vm361, %v504, 0
        %v519 = vsel %vm361, %v505, 0
        %521 = vmatpush.bf16.msra.mxu0 0
        %522 = vmatpush.bf16.msra.mxu0 0
        %523 = vmatpush.bf16.msra.mxu0 0
        %524 = vmatpush.bf16.msra.mxu0 0
        %525 = vmatpush.bf16.msra.mxu0 0
        %526 = vmatpush.bf16.msra.mxu0 0
        %527 = vmatpush.bf16.msra.mxu0 0
        %528 = vmatpush.bf16.msra.mxu0 %v510
        %529 = vmatmul.bf16.gmra.mxu0 %v507
        %v530 = vpop.f32.mrf.mxu0
        %v531 = vadd.f32 0.0, %v530
        %v532 = vpop.f32.mrf.mxu0
        %533 = vdwg.mxu0
        %534 = vmatpush.bf16.msra.mxu0 0
        %535 = vmatpush.bf16.msra.mxu0 0
        %536 = vmatpush.bf16.msra.mxu0 0
        %537 = vmatpush.bf16.msra.mxu0 0
        %538 = vmatpush.bf16.msra.mxu0 0
        %539 = vmatpush.bf16.msra.mxu0 0
        %540 = vmatpush.bf16.msra.mxu0 0
        %541 = vmatpush.bf16.msra.mxu0 %v513
        %542 = vmatmul.bf16.gmra.mxu0 %v507
        %v543 = vpop.f32.mrf.mxu0
        %v544 = vadd.f32 0.0, %v543
        %v545 = vpop.f32.mrf.mxu0
        %546 = vdwg.mxu0
        %547 = vmatpush.bf16.msra.mxu0 0
        %548 = vmatpush.bf16.msra.mxu0 0
        %549 = vmatpush.bf16.msra.mxu0 0
        %550 = vmatpush.bf16.msra.mxu0 0
        %551 = vmatpush.bf16.msra.mxu0 0
        %552 = vmatpush.bf16.msra.mxu0 0
        %553 = vmatpush.bf16.msra.mxu0 0
        %554 = vmatpush.bf16.msra.mxu0 %v516
        %555 = vmatmul.bf16.gmra.mxu0 %v507
        %v556 = vpop.f32.mrf.mxu0
        %v557 = vadd.f32 0.0, %v556
        %v558 = vpop.f32.mrf.mxu0
        %559 = vdwg.mxu0
        %560 = vmatpush.bf16.msra.mxu0 0
        %561 = vmatpush.bf16.msra.mxu0 0
        %562 = vmatpush.bf16.msra.mxu0 0
        %563 = vmatpush.bf16.msra.mxu0 0
        %564 = vmatpush.bf16.msra.mxu0 0
        %565 = vmatpush.bf16.msra.mxu0 0
        %566 = vmatpush.bf16.msra.mxu0 0
        %567 = vmatpush.bf16.msra.mxu0 %v519
        %568 = vmatmul.bf16.gmra.mxu0 %v507
        %v569 = vpop.f32.mrf.mxu0
        %v570 = vadd.f32 0.0, %v569
        %v571 = vpop.f32.mrf.mxu0
        %572 = vdwg.mxu0
        %v573 = vadd.f32 %v447, %v531
        %v574 = vadd.f32 %v460, %v544
        %v575 = vadd.f32 %v473, %v557
        %v576 = vadd.f32 %v486, %v570
        %577 = vrot.lane.b32.xlu0 %v338, 116
        %v578 = vpop.permute.xlu0 %577
        %579 = vrot.lane.b32.xlu0 %v294, 110
        %v580 = vpop.permute.xlu0 %579
        %581 = vrot.lane.b32.xlu0 %v296, 110
        %v582 = vpop.permute.xlu0 %581
        %583 = vrot.lane.b32.xlu0 %v298, 110
        %v584 = vpop.permute.xlu0 %583
        %585 = vrot.lane.b32.xlu0 %v300, 110
        %v586 = vpop.permute.xlu0 %585
        %587 = vrot.lane.b32.xlu0 %v291, 110
        %v588 = vpop.permute.xlu0 %587
        %vm589 = vcmask 900096
        %v590 = vsel %vm589, %v580, %v582
        %v591 = vsel %vm589, %v582, %v584
        %v592 = vsel %vm589, %v584, %v586
        %v593 = vsel %vm589, %v586, %v588
        %v595 = vsel %vm357, %v578, 0
        %v598 = vsel %vm361, %v590, 0
        %v601 = vsel %vm361, %v591, 0
        %v604 = vsel %vm361, %v592, 0
        %v607 = vsel %vm361, %v593, 0
        %609 = vmatpush.bf16.msra.mxu0 0
        %610 = vmatpush.bf16.msra.mxu0 0
        %611 = vmatpush.bf16.msra.mxu0 0
        %612 = vmatpush.bf16.msra.mxu0 0
        %613 = vmatpush.bf16.msra.mxu0 0
        %614 = vmatpush.bf16.msra.mxu0 0
        %615 = vmatpush.bf16.msra.mxu0 0
        %616 = vmatpush.bf16.msra.mxu0 %v598
        %617 = vmatmul.bf16.gmra.mxu0 %v595
        %v618 = vpop.f32.mrf.mxu0
        %v619 = vadd.f32 0.0, %v618
        %v620 = vpop.f32.mrf.mxu0
        %621 = vdwg.mxu0
        %622 = vmatpush.bf16.msra.mxu0 0
        %623 = vmatpush.bf16.msra.mxu0 0
        %624 = vmatpush.bf16.msra.mxu0 0
        %625 = vmatpush.bf16.msra.mxu0 0
        %626 = vmatpush.bf16.msra.mxu0 0
        %627 = vmatpush.bf16.msra.mxu0 0
        %628 = vmatpush.bf16.msra.mxu0 0
        %629 = vmatpush.bf16.msra.mxu0 %v601
        %630 = vmatmul.bf16.gmra.mxu0 %v595
        %v631 = vpop.f32.mrf.mxu0
        %v632 = vadd.f32 0.0, %v631
        %v633 = vpop.f32.mrf.mxu0
        %634 = vdwg.mxu0
        %635 = vmatpush.bf16.msra.mxu0 0
        %636 = vmatpush.bf16.msra.mxu0 0
        %637 = vmatpush.bf16.msra.mxu0 0
        %638 = vmatpush.bf16.msra.mxu0 0
        %639 = vmatpush.bf16.msra.mxu0 0
        %640 = vmatpush.bf16.msra.mxu0 0
        %641 = vmatpush.bf16.msra.mxu0 0
        %642 = vmatpush.bf16.msra.mxu0 %v604
        %643 = vmatmul.bf16.gmra.mxu0 %v595
        %v644 = vpop.f32.mrf.mxu0
        %v645 = vadd.f32 0.0, %v644
        %v646 = vpop.f32.mrf.mxu0
        %647 = vdwg.mxu0
        %648 = vmatpush.bf16.msra.mxu0 0
        %649 = vmatpush.bf16.msra.mxu0 0
        %650 = vmatpush.bf16.msra.mxu0 0
        %651 = vmatpush.bf16.msra.mxu0 0
        %652 = vmatpush.bf16.msra.mxu0 0
        %653 = vmatpush.bf16.msra.mxu0 0
        %654 = vmatpush.bf16.msra.mxu0 0
        %655 = vmatpush.bf16.msra.mxu0 %v607
        %656 = vmatmul.bf16.gmra.mxu0 %v595
        %v657 = vpop.f32.mrf.mxu0
        %v658 = vadd.f32 0.0, %v657
        %v659 = vpop.f32.mrf.mxu0
        %660 = vdwg.mxu0
        %v661 = vadd.f32 %v573, %v619
        %v662 = vadd.f32 %v574, %v632
        %v663 = vadd.f32 %v575, %v645
        %v664 = vadd.f32 %v576, %v658
        %665 = vrot.lane.b32.xlu0 %v338, 112
        %v666 = vpop.permute.xlu0 %665
        %667 = vrot.lane.b32.xlu0 %v294, 109
        %v668 = vpop.permute.xlu0 %667
        %669 = vrot.lane.b32.xlu0 %v296, 109
        %v670 = vpop.permute.xlu0 %669
        %671 = vrot.lane.b32.xlu0 %v298, 109
        %v672 = vpop.permute.xlu0 %671
        %673 = vrot.lane.b32.xlu0 %v300, 109
        %v674 = vpop.permute.xlu0 %673
        %675 = vrot.lane.b32.xlu0 %v291, 109
        %v676 = vpop.permute.xlu0 %675
        %vm677 = vcmask 891904
        %v678 = vsel %vm677, %v668, %v670
        %v679 = vsel %vm677, %v670, %v672
        %v680 = vsel %vm677, %v672, %v674
        %v681 = vsel %vm677, %v674, %v676
        %v683 = vsel %vm357, %v666, 0
        %v686 = vsel %vm361, %v678, 0
        %v689 = vsel %vm361, %v679, 0
        %v692 = vsel %vm361, %v680, 0
        %v695 = vsel %vm361, %v681, 0
        %697 = vmatpush.bf16.msra.mxu0 0
        %698 = vmatpush.bf16.msra.mxu0 0
        %699 = vmatpush.bf16.msra.mxu0 0
        %700 = vmatpush.bf16.msra.mxu0 0
        %701 = vmatpush.bf16.msra.mxu0 0
        %702 = vmatpush.bf16.msra.mxu0 0
        %703 = vmatpush.bf16.msra.mxu0 0
        %704 = vmatpush.bf16.msra.mxu0 %v686
        %705 = vmatmul.bf16.gmra.mxu0 %v683
        %v706 = vpop.f32.mrf.mxu0
        %v707 = vadd.f32 0.0, %v706
        %v708 = vpop.f32.mrf.mxu0
        %709 = vdwg.mxu0
        %710 = vmatpush.bf16.msra.mxu0 0
        %711 = vmatpush.bf16.msra.mxu0 0
        %712 = vmatpush.bf16.msra.mxu0 0
        %713 = vmatpush.bf16.msra.mxu0 0
        %714 = vmatpush.bf16.msra.mxu0 0
        %715 = vmatpush.bf16.msra.mxu0 0
        %716 = vmatpush.bf16.msra.mxu0 0
        %717 = vmatpush.bf16.msra.mxu0 %v689
        %718 = vmatmul.bf16.gmra.mxu0 %v683
        %v719 = vpop.f32.mrf.mxu0
        %v720 = vadd.f32 0.0, %v719
        %v721 = vpop.f32.mrf.mxu0
        %722 = vdwg.mxu0
        %723 = vmatpush.bf16.msra.mxu0 0
        %724 = vmatpush.bf16.msra.mxu0 0
        %725 = vmatpush.bf16.msra.mxu0 0
        %726 = vmatpush.bf16.msra.mxu0 0
        %727 = vmatpush.bf16.msra.mxu0 0
        %728 = vmatpush.bf16.msra.mxu0 0
        %729 = vmatpush.bf16.msra.mxu0 0
        %730 = vmatpush.bf16.msra.mxu0 %v692
        %731 = vmatmul.bf16.gmra.mxu0 %v683
        %v732 = vpop.f32.mrf.mxu0
        %v733 = vadd.f32 0.0, %v732
        %v734 = vpop.f32.mrf.mxu0
        %735 = vdwg.mxu0
        %736 = vmatpush.bf16.msra.mxu0 0
        %737 = vmatpush.bf16.msra.mxu0 0
        %738 = vmatpush.bf16.msra.mxu0 0
        %739 = vmatpush.bf16.msra.mxu0 0
        %740 = vmatpush.bf16.msra.mxu0 0
        %741 = vmatpush.bf16.msra.mxu0 0
        %742 = vmatpush.bf16.msra.mxu0 0
        %743 = vmatpush.bf16.msra.mxu0 %v695
        %744 = vmatmul.bf16.gmra.mxu0 %v683
        %v745 = vpop.f32.mrf.mxu0
        %v746 = vadd.f32 0.0, %v745
        %v747 = vpop.f32.mrf.mxu0
        %748 = vdwg.mxu0
        %v749 = vadd.f32 %v661, %v707
        %v750 = vadd.f32 %v662, %v720
        %v751 = vadd.f32 %v663, %v733
        %v752 = vadd.f32 %v664, %v746
        %753 = vrot.lane.b32.xlu0 %v338, 108
        %v754 = vpop.permute.xlu0 %753
        %755 = vrot.lane.b32.xlu0 %v294, 108
        %v756 = vpop.permute.xlu0 %755
        %757 = vrot.lane.b32.xlu0 %v296, 108
        %v758 = vpop.permute.xlu0 %757
        %759 = vrot.lane.b32.xlu0 %v298, 108
        %v760 = vpop.permute.xlu0 %759
        %761 = vrot.lane.b32.xlu0 %v300, 108
        %v762 = vpop.permute.xlu0 %761
        %763 = vrot.lane.b32.xlu0 %v291, 108
        %v764 = vpop.permute.xlu0 %763
        %vm765 = vcmask 883712
        %v766 = vsel %vm765, %v756, %v758
        %v767 = vsel %vm765, %v758, %v760
        %v768 = vsel %vm765, %v760, %v762
        %v769 = vsel %vm765, %v762, %v764
        %v771 = vsel %vm357, %v754, 0
        %v774 = vsel %vm361, %v766, 0
        %v777 = vsel %vm361, %v767, 0
        %v780 = vsel %vm361, %v768, 0
        %v783 = vsel %vm361, %v769, 0
        %785 = vmatpush.bf16.msra.mxu0 0
        %786 = vmatpush.bf16.msra.mxu0 0
        %787 = vmatpush.bf16.msra.mxu0 0
        %788 = vmatpush.bf16.msra.mxu0 0
        %789 = vmatpush.bf16.msra.mxu0 0
        %790 = vmatpush.bf16.msra.mxu0 0
        %791 = vmatpush.bf16.msra.mxu0 0
        %792 = vmatpush.bf16.msra.mxu0 %v774
        %793 = vmatmul.bf16.gmra.mxu0 %v771
        %v794 = vpop.f32.mrf.mxu0
        %v795 = vadd.f32 0.0, %v794
        %v796 = vpop.f32.mrf.mxu0
        %797 = vdwg.mxu0
        %798 = vmatpush.bf16.msra.mxu0 0
        %799 = vmatpush.bf16.msra.mxu0 0
        %800 = vmatpush.bf16.msra.mxu0 0
        %801 = vmatpush.bf16.msra.mxu0 0
        %802 = vmatpush.bf16.msra.mxu0 0
        %803 = vmatpush.bf16.msra.mxu0 0
        %804 = vmatpush.bf16.msra.mxu0 0
        %805 = vmatpush.bf16.msra.mxu0 %v777
        %806 = vmatmul.bf16.gmra.mxu0 %v771
        %v807 = vpop.f32.mrf.mxu0
        %v808 = vadd.f32 0.0, %v807
        %v809 = vpop.f32.mrf.mxu0
        %810 = vdwg.mxu0
        %811 = vmatpush.bf16.msra.mxu0 0
        %812 = vmatpush.bf16.msra.mxu0 0
        %813 = vmatpush.bf16.msra.mxu0 0
        %814 = vmatpush.bf16.msra.mxu0 0
        %815 = vmatpush.bf16.msra.mxu0 0
        %816 = vmatpush.bf16.msra.mxu0 0
        %817 = vmatpush.bf16.msra.mxu0 0
        %818 = vmatpush.bf16.msra.mxu0 %v780
        %819 = vmatmul.bf16.gmra.mxu0 %v771
        %v820 = vpop.f32.mrf.mxu0
        %v821 = vadd.f32 0.0, %v820
        %v822 = vpop.f32.mrf.mxu0
        %823 = vdwg.mxu0
        %824 = vmatpush.bf16.msra.mxu0 0
        %825 = vmatpush.bf16.msra.mxu0 0
        %826 = vmatpush.bf16.msra.mxu0 0
        %827 = vmatpush.bf16.msra.mxu0 0
        %828 = vmatpush.bf16.msra.mxu0 0
        %829 = vmatpush.bf16.msra.mxu0 0
        %830 = vmatpush.bf16.msra.mxu0 0
        %831 = vmatpush.bf16.msra.mxu0 %v783
        %832 = vmatmul.bf16.gmra.mxu0 %v771
        %v833 = vpop.f32.mrf.mxu0
        %v834 = vadd.f32 0.0, %v833
        %v835 = vpop.f32.mrf.mxu0
        %836 = vdwg.mxu0
        %v837 = vadd.f32 %v749, %v795
        %v838 = vadd.f32 %v750, %v808
        %v839 = vadd.f32 %v751, %v821
        %v840 = vadd.f32 %v752, %v834
        %841 = vrot.lane.b32.xlu0 %v338, 104
        %v842 = vpop.permute.xlu0 %841
        %843 = vrot.lane.b32.xlu0 %v294, 92
        %v844 = vpop.permute.xlu0 %843
        %845 = vrot.lane.b32.xlu0 %v296, 92
        %v846 = vpop.permute.xlu0 %845
        %847 = vrot.lane.b32.xlu0 %v298, 92
        %v848 = vpop.permute.xlu0 %847
        %849 = vrot.lane.b32.xlu0 %v300, 92
        %v850 = vpop.permute.xlu0 %849
        %851 = vrot.lane.b32.xlu0 %v291, 92
        %v852 = vpop.permute.xlu0 %851
        %vm853 = vcmask 752640
        %v854 = vsel %vm853, %v844, %v846
        %v855 = vsel %vm853, %v846, %v848
        %v856 = vsel %vm853, %v848, %v850
        %v857 = vsel %vm853, %v850, %v852
        %v859 = vsel %vm357, %v842, 0
        %v862 = vsel %vm361, %v854, 0
        %v865 = vsel %vm361, %v855, 0
        %v868 = vsel %vm361, %v856, 0
        %v871 = vsel %vm361, %v857, 0
        %873 = vmatpush.bf16.msra.mxu0 0
        %874 = vmatpush.bf16.msra.mxu0 0
        %875 = vmatpush.bf16.msra.mxu0 0
        %876 = vmatpush.bf16.msra.mxu0 0
        %877 = vmatpush.bf16.msra.mxu0 0
        %878 = vmatpush.bf16.msra.mxu0 0
        %879 = vmatpush.bf16.msra.mxu0 0
        %880 = vmatpush.bf16.msra.mxu0 %v862
        %881 = vmatmul.bf16.gmra.mxu0 %v859
        %v882 = vpop.f32.mrf.mxu0
        %v883 = vadd.f32 0.0, %v882
        %v884 = vpop.f32.mrf.mxu0
        %885 = vdwg.mxu0
        %886 = vmatpush.bf16.msra.mxu0 0
        %887 = vmatpush.bf16.msra.mxu0 0
        %888 = vmatpush.bf16.msra.mxu0 0
        %889 = vmatpush.bf16.msra.mxu0 0
        %890 = vmatpush.bf16.msra.mxu0 0
        %891 = vmatpush.bf16.msra.mxu0 0
        %892 = vmatpush.bf16.msra.mxu0 0
        %893 = vmatpush.bf16.msra.mxu0 %v865
        %894 = vmatmul.bf16.gmra.mxu0 %v859
        %v895 = vpop.f32.mrf.mxu0
        %v896 = vadd.f32 0.0, %v895
        %v897 = vpop.f32.mrf.mxu0
        %898 = vdwg.mxu0
        %899 = vmatpush.bf16.msra.mxu0 0
        %900 = vmatpush.bf16.msra.mxu0 0
        %901 = vmatpush.bf16.msra.mxu0 0
        %902 = vmatpush.bf16.msra.mxu0 0
        %903 = vmatpush.bf16.msra.mxu0 0
        %904 = vmatpush.bf16.msra.mxu0 0
        %905 = vmatpush.bf16.msra.mxu0 0
        %906 = vmatpush.bf16.msra.mxu0 %v868
        %907 = vmatmul.bf16.gmra.mxu0 %v859
        %v908 = vpop.f32.mrf.mxu0
        %v909 = vadd.f32 0.0, %v908
        %v910 = vpop.f32.mrf.mxu0
        %911 = vdwg.mxu0
        %912 = vmatpush.bf16.msra.mxu0 0
        %913 = vmatpush.bf16.msra.mxu0 0
        %914 = vmatpush.bf16.msra.mxu0 0
        %915 = vmatpush.bf16.msra.mxu0 0
        %916 = vmatpush.bf16.msra.mxu0 0
        %917 = vmatpush.bf16.msra.mxu0 0
        %918 = vmatpush.bf16.msra.mxu0 0
        %919 = vmatpush.bf16.msra.mxu0 %v871
        %920 = vmatmul.bf16.gmra.mxu0 %v859
        %v921 = vpop.f32.mrf.mxu0
        %v922 = vadd.f32 0.0, %v921
        %v923 = vpop.f32.mrf.mxu0
        %924 = vdwg.mxu0
        %v925 = vadd.f32 %v837, %v883
        %v926 = vadd.f32 %v838, %v896
        %v927 = vadd.f32 %v839, %v909
        %v928 = vadd.f32 %v840, %v922
        %929 = vrot.lane.b32.xlu0 %v338, 100
        %v930 = vpop.permute.xlu0 %929
        %931 = vrot.lane.b32.xlu0 %v294, 91
        %v932 = vpop.permute.xlu0 %931
        %933 = vrot.lane.b32.xlu0 %v296, 91
        %v934 = vpop.permute.xlu0 %933
        %935 = vrot.lane.b32.xlu0 %v298, 91
        %v936 = vpop.permute.xlu0 %935
        %937 = vrot.lane.b32.xlu0 %v300, 91
        %v938 = vpop.permute.xlu0 %937
        %939 = vrot.lane.b32.xlu0 %v291, 91
        %v940 = vpop.permute.xlu0 %939
        %vm941 = vcmask 744448
        %v942 = vsel %vm941, %v932, %v934
        %v943 = vsel %vm941, %v934, %v936
        %v944 = vsel %vm941, %v936, %v938
        %v945 = vsel %vm941, %v938, %v940
        %v947 = vsel %vm357, %v930, 0
        %v950 = vsel %vm361, %v942, 0
        %v953 = vsel %vm361, %v943, 0
        %v956 = vsel %vm361, %v944, 0
        %v959 = vsel %vm361, %v945, 0
        %961 = vmatpush.bf16.msra.mxu0 0
        %962 = vmatpush.bf16.msra.mxu0 0
        %963 = vmatpush.bf16.msra.mxu0 0
        %964 = vmatpush.bf16.msra.mxu0 0
        %965 = vmatpush.bf16.msra.mxu0 0
        %966 = vmatpush.bf16.msra.mxu0 0
        %967 = vmatpush.bf16.msra.mxu0 0
        %968 = vmatpush.bf16.msra.mxu0 %v950
        %969 = vmatmul.bf16.gmra.mxu0 %v947
        %v970 = vpop.f32.mrf.mxu0
        %v971 = vadd.f32 0.0, %v970
        %v972 = vpop.f32.mrf.mxu0
        %973 = vdwg.mxu0
        %974 = vmatpush.bf16.msra.mxu0 0
        %975 = vmatpush.bf16.msra.mxu0 0
        %976 = vmatpush.bf16.msra.mxu0 0
        %977 = vmatpush.bf16.msra.mxu0 0
        %978 = vmatpush.bf16.msra.mxu0 0
        %979 = vmatpush.bf16.msra.mxu0 0
        %980 = vmatpush.bf16.msra.mxu0 0
        %981 = vmatpush.bf16.msra.mxu0 %v953
        %982 = vmatmul.bf16.gmra.mxu0 %v947
        %v983 = vpop.f32.mrf.mxu0
        %v984 = vadd.f32 0.0, %v983
        %v985 = vpop.f32.mrf.mxu0
        %986 = vdwg.mxu0
        %987 = vmatpush.bf16.msra.mxu0 0
        %988 = vmatpush.bf16.msra.mxu0 0
        %989 = vmatpush.bf16.msra.mxu0 0
        %990 = vmatpush.bf16.msra.mxu0 0
        %991 = vmatpush.bf16.msra.mxu0 0
        %992 = vmatpush.bf16.msra.mxu0 0
        %993 = vmatpush.bf16.msra.mxu0 0
        %994 = vmatpush.bf16.msra.mxu0 %v956
        %995 = vmatmul.bf16.gmra.mxu0 %v947
        %v996 = vpop.f32.mrf.mxu0
        %v997 = vadd.f32 0.0, %v996
        %v998 = vpop.f32.mrf.mxu0
        %999 = vdwg.mxu0
        %1000 = vmatpush.bf16.msra.mxu0 0
        %1001 = vmatpush.bf16.msra.mxu0 0
        %1002 = vmatpush.bf16.msra.mxu0 0
        %1003 = vmatpush.bf16.msra.mxu0 0
        %1004 = vmatpush.bf16.msra.mxu0 0
        %1005 = vmatpush.bf16.msra.mxu0 0
        %1006 = vmatpush.bf16.msra.mxu0 0
        %1007 = vmatpush.bf16.msra.mxu0 %v959
        %1008 = vmatmul.bf16.gmra.mxu0 %v947
        %v1009 = vpop.f32.mrf.mxu0
        %v1010 = vadd.f32 0.0, %v1009
        %v1011 = vpop.f32.mrf.mxu0
        %1012 = vdwg.mxu0
        %v1013 = vadd.f32 %v925, %v971
        %v1014 = vadd.f32 %v926, %v984
        %v1015 = vadd.f32 %v927, %v997
        %v1016 = vadd.f32 %v928, %v1010
        %1017 = vrot.lane.b32.xlu0 %v338, 96
        %v1018 = vpop.permute.xlu0 %1017
        %1019 = vrot.lane.b32.xlu0 %v294, 90
        %v1020 = vpop.permute.xlu0 %1019
        %1021 = vrot.lane.b32.xlu0 %v296, 90
        %v1022 = vpop.permute.xlu0 %1021
        %1023 = vrot.lane.b32.xlu0 %v298, 90
        %v1024 = vpop.permute.xlu0 %1023
        %1025 = vrot.lane.b32.xlu0 %v300, 90
        %v1026 = vpop.permute.xlu0 %1025
        %1027 = vrot.lane.b32.xlu0 %v291, 90
        %v1028 = vpop.permute.xlu0 %1027
        %vm1029 = vcmask 736256
        %v1030 = vsel %vm1029, %v1020, %v1022
        %v1031 = vsel %vm1029, %v1022, %v1024
        %v1032 = vsel %vm1029, %v1024, %v1026
        %v1033 = vsel %vm1029, %v1026, %v1028
        %v1035 = vsel %vm357, %v1018, 0
        %v1038 = vsel %vm361, %v1030, 0
        %v1041 = vsel %vm361, %v1031, 0
        %v1044 = vsel %vm361, %v1032, 0
        %v1047 = vsel %vm361, %v1033, 0
        %1049 = vmatpush.bf16.msra.mxu0 0
        %1050 = vmatpush.bf16.msra.mxu0 0
        %1051 = vmatpush.bf16.msra.mxu0 0
        %1052 = vmatpush.bf16.msra.mxu0 0
        %1053 = vmatpush.bf16.msra.mxu0 0
        %1054 = vmatpush.bf16.msra.mxu0 0
        %1055 = vmatpush.bf16.msra.mxu0 0
        %1056 = vmatpush.bf16.msra.mxu0 %v1038
        %1057 = vmatmul.bf16.gmra.mxu0 %v1035
        %v1058 = vpop.f32.mrf.mxu0
        %v1059 = vadd.f32 0.0, %v1058
        %v1060 = vpop.f32.mrf.mxu0
        %1061 = vdwg.mxu0
        %1062 = vmatpush.bf16.msra.mxu0 0
        %1063 = vmatpush.bf16.msra.mxu0 0
        %1064 = vmatpush.bf16.msra.mxu0 0
        %1065 = vmatpush.bf16.msra.mxu0 0
        %1066 = vmatpush.bf16.msra.mxu0 0
        %1067 = vmatpush.bf16.msra.mxu0 0
        %1068 = vmatpush.bf16.msra.mxu0 0
        %1069 = vmatpush.bf16.msra.mxu0 %v1041
        %1070 = vmatmul.bf16.gmra.mxu0 %v1035
        %v1071 = vpop.f32.mrf.mxu0
        %v1072 = vadd.f32 0.0, %v1071
        %v1073 = vpop.f32.mrf.mxu0
        %1074 = vdwg.mxu0
        %1075 = vmatpush.bf16.msra.mxu0 0
        %1076 = vmatpush.bf16.msra.mxu0 0
        %1077 = vmatpush.bf16.msra.mxu0 0
        %1078 = vmatpush.bf16.msra.mxu0 0
        %1079 = vmatpush.bf16.msra.mxu0 0
        %1080 = vmatpush.bf16.msra.mxu0 0
        %1081 = vmatpush.bf16.msra.mxu0 0
        %1082 = vmatpush.bf16.msra.mxu0 %v1044
        %1083 = vmatmul.bf16.gmra.mxu0 %v1035
        %v1084 = vpop.f32.mrf.mxu0
        %v1085 = vadd.f32 0.0, %v1084
        %v1086 = vpop.f32.mrf.mxu0
        %1087 = vdwg.mxu0
        %1088 = vmatpush.bf16.msra.mxu0 0
        %1089 = vmatpush.bf16.msra.mxu0 0
        %1090 = vmatpush.bf16.msra.mxu0 0
        %1091 = vmatpush.bf16.msra.mxu0 0
        %1092 = vmatpush.bf16.msra.mxu0 0
        %1093 = vmatpush.bf16.msra.mxu0 0
        %1094 = vmatpush.bf16.msra.mxu0 0
        %1095 = vmatpush.bf16.msra.mxu0 %v1047
        %1096 = vmatmul.bf16.gmra.mxu0 %v1035
        %v1097 = vpop.f32.mrf.mxu0
        %v1098 = vadd.f32 0.0, %v1097
        %v1099 = vpop.f32.mrf.mxu0
        %1100 = vdwg.mxu0
        %v1101 = vadd.f32 %v1013, %v1059
        %v1102 = vadd.f32 %v1014, %v1072
        %v1103 = vadd.f32 %v1015, %v1085
        %v1104 = vadd.f32 %v1016, %v1098
        %1106 = vset.pattern.permute.xlu0 3
        %1107 = vperm.xlu0 %1106, %v335
        %v1108 = vpop.permute.xlu0 %1107
        %v1110 = vadd.f32 %v1101, %v1108
        %v1111 = vadd.f32 %v1102, %v1108
        %v1112 = vadd.f32 %v1103, %v1108
        %v1113 = vadd.f32 %v1104, %v1108
        %1114 = vst [vmem:[%s284] sm:$0xff] %v1110
        %1115 = vst [vmem:[%s284 + $0x8] sm:$0xff] %v1111
        %1116 = vst [vmem:[%s284 + $0x10] sm:$0xff] %v1112
        %1117 = vst [vmem:[%s284 + $0x18] sm:$0xff] %v1113
        %s1118 = sand.u32 %s126, 1
        %s1119 = scalar_lea.sflag [#allocation4], %s1118
        %s1120 = sand.u32 %s126, 1
        %s1121 = smul.addr %s1120, 32
        %s1122 = scalar_lea.vmem [#allocation9], %s1121
        // Predicated region
        $region53: #{tpu_custom_call.1} parent=35 // pred_check
          %p1123 = pneg %p136
        $region54: #{tpu_custom_call.1} parent=35 // pred_check_branch
          %1125 = sbr.rel (%p1123) target = $region56
        $region55: #{tpu_custom_call.1} parent=35 // pred_region
          %s1126 = smul.u32 4, %s20
          %1128 = vsyncadd %s1119, 0
          %s1129 = smul.addr %s1126, 8
          %s1130 = scalar_lea.hbm %s4, %s1129
          %s1132 = sshll.u32 %s1122, 4
          %s1133 = int_to_ptr.vmem [resolvable:$true] %s1132
          %s1134 = sshll.u32 %s1130, 4
          %s1135 = int_to_ptr.hbm [resolvable:$true] %s1134
          %1137 = dma.vmem_to_hbm [thread:$0]  %s1133, 512, %s1135, %s1119
        $region56: #{tpu_custom_call.1} parent=35 // pred_fallthru
          _
      $region36: #{tpu_custom_call.1} parent=5 // pred_fallthru
        _
      %p1138 = scmp.le.s32.totalorder 2, %s15
      // Predicated region
      $region57: #{tpu_custom_call.1} parent=5 // pred_check
        %p1139 = pneg %p1138
      $region58: #{tpu_custom_call.1} parent=5 // pred_check_branch
        %1141 = sbr.rel (%p1139) target = $region60
      $region59: #{tpu_custom_call.1} parent=5 // pred_region
        %s1142 = ssub.s32 %s15, 2
        // Predicated region
        $region61: #{tpu_custom_call.1} parent=59 // pred_check
          %p1143 = pneg %p142
        $region62: #{tpu_custom_call.1} parent=59 // pred_check_branch
          %1145 = sbr.rel (%p1143) target = $region64
        $region63: #{tpu_custom_call.1} parent=59 // pred_region
          %s1146 = sand.u32 %s127, 1
          %s1147 = scalar_lea.sflag [#allocation4], %s1146
          %s1148 = sand.u32 %s127, 1
          %s1149 = smul.addr %s1148, 32
          %s1150 = scalar_lea.vmem [#allocation9], %s1149
          %1152 = dma.done %s1147, 512
        $region64: #{tpu_custom_call.1} parent=59 // pred_fallthru
          _
      $region60: #{tpu_custom_call.1} parent=5 // pred_fallthru
        _
    $region6: #{tpu_custom_call.1} parent=1 // loop_footer
      %s19 = sadd.s32 1, %s15
    $region7: #{tpu_custom_call.1} parent=1 // loop_footer_branch
      %14 = sbr.rel target = $region3
    $region8: #{tpu_custom_call.1} parent=1 // loop_exit
      _
    %1153 = vsyncpa [#allocation3], 1
    %s1154 = scalar_lea.sflag [#allocation3], 1
    %1155 = vsyncpa %s1154, 1
    %1156 = vsyncpa [#allocation6], 1
    %1157 = vsyncpa [#allocation4], 1
    %s1158 = scalar_lea.sflag [#allocation4], 1
    %1159 = vsyncpa %s1158, 1

</llo_original>
